<compile_context>
chip_gen: v6e
topology: v6e:2x2x1
jax: 0.10.0
libtpu: 0.0.40
codegen_flags: <defaults>
</compile_context>

<pallas_src>
import functools
import inspect
import math

import jax
import jax.numpy as jnp
from jax.experimental import pallas as pl
from jax.experimental.pallas import tpu as pltpu


# ----------------------------------------------------------------------------
# Static (import-time) feature / hardware probes. No kernel execution here.
# ----------------------------------------------------------------------------
def _buffered_supported():
    if not hasattr(pl, "Buffered"):
        return False
    try:
        return "pipeline_mode" in inspect.signature(pl.BlockSpec).parameters
    except (TypeError, ValueError):
        return False


_HAS_BUFFERED = _buffered_supported()

_VMEM_BUDGET_CACHE = [None]


def _vmem_budget_bytes():
    """VMEM budget for one kernel, derived from the chip's capacity."""
    if _VMEM_BUDGET_CACHE[0] is None:
        try:
            cap = int(pltpu.get_tpu_info().vmem_capacity_bytes)
        except Exception:              # host-side query only; never wraps kernel exec
            cap = 64 * 1024 * 1024     # conservative: assume v7x (64 MiB per TC)
        # Leave headroom for double buffering / compiler scratch:
        #   v7x (64 MiB)  -> ~48 MiB budget, v5e/v6e (128 MiB) -> ~100 MiB budget.
        _VMEM_BUDGET_CACHE[0] = max(32 << 20, min(cap - (16 << 20), 100 << 20))
    return _VMEM_BUDGET_CACHE[0]


# ----------------------------------------------------------------------------
# Small helpers
# ----------------------------------------------------------------------------
def _round_up(x, m):
    return ((x + m - 1) // m) * m


def _pick_block_b(batch8):
    """Big MXU-friendly row tiles.

    Only insist on >=2 batch tiles when the batch is large enough that splitting
    the 'parallel' axis across v7x's two TensorCores is worthwhile; a single
    large tile is fine on v5e/v6e (one TC) and for small batches.
    """
    if batch8 >= 1024:
        return 512
    if batch8 > 512:
        return 256
    return batch8


def _pick_tile_n(out_dim_padded, max_tile=512):
    """Lane-dense fan_out tile for the last layer (multiple of 128, divides out)."""
    tile_n = min(out_dim_padded, max_tile)
    while out_dim_padded % tile_n:
        tile_n -= 128
    return tile_n


def _resident_footprint(block_b, dims_p, wbytes, weight_bufs):
    """Approximate VMEM bytes for the fully-resident path (bf16 activations)."""
    in_p, out_p, max_p = dims_p[0], dims_p[-1], max(dims_p)
    x_bytes = block_b * in_p * 2 * 2                      # bf16 input, double-buffered
    out_bytes = block_b * out_p * 4 * 2                   # f32 output, double-buffered
    w_bytes = sum(dims_p[i] * dims_p[i + 1]
                  for i in range(len(dims_p) - 1)) * wbytes * weight_bufs
    b_bytes = sum(dims_p[1:]) * 4 * weight_bufs
    interm = block_b * max_p * 4 * 3                      # in-kernel f32 activation temps
    return x_bytes + out_bytes + w_bytes + b_bytes + interm


def _tiled_footprint(block_b, tile_n, dims_p, wbytes, weight_bufs, last_w_bufs):
    """Approximate VMEM bytes for the n-tiled fallback path."""
    in_p, hid_p = dims_p[0], dims_p[-2]
    x_bytes = block_b * in_p * 2 * 2
    out_bytes = block_b * tile_n * 4 * 2
    hid_w = sum(dims_p[i] * dims_p[i + 1]
                for i in range(len(dims_p) - 2)) * wbytes * weight_bufs
    hid_b = sum(dims_p[1:-1]) * 4 * weight_bufs
    last_w = hid_p * tile_n * wbytes * last_w_bufs
    last_b = tile_n * 4 * last_w_bufs
    scratch = block_b * hid_p * 2                         # bf16 hidden cache
    interm = block_b * max(dims_p) * 4 * 3
    return x_bytes + out_bytes + hid_w + hid_b + last_w + last_b + scratch + interm


# ----------------------------------------------------------------------------
# Kernels
# ----------------------------------------------------------------------------
def _mapnet_resident_kernel(*refs, num_layers):
    """refs = (x, w0, b0, ..., w_{L-1}, b_{L-1}, out). Grid = (batch_tiles,).

    All weights/biases use constant block indices, so they stay VMEM-resident
    across the grid; each grid step runs the whole MLP for one batch tile and
    stores one full-width (block_b, out_dim_p) f32 slab (lane-dense stores).
    """
    x_ref = refs[0]
    param_refs = refs[1:1 + 2 * num_layers]
    o_ref = refs[1 + 2 * num_layers]

    h = x_ref[...]                                        # bf16 activations
    for layer in range(num_layers):
        w = param_refs[2 * layer][...]
        b = param_refs[2 * layer + 1][...]
        acc = jnp.dot(h.astype(w.dtype), w,
                      preferred_element_type=jnp.float32) + b.astype(jnp.float32)
        if layer != num_layers - 1:
            # bias add + ReLU in f32 (safe on v5e's f32-only VPU), store bf16.
            h = jnp.maximum(acc, 0.0).astype(x_ref.dtype)
        else:
            h = acc
    o_ref[...] = h.astype(o_ref.dtype)


def _mapnet_tiled_kernel(*refs, num_layers):
    """refs = (x, w0, b0, ..., out, h_scratch). Grid = (batch_tiles, n_tiles).

    Hidden layers run once per batch tile (n-tile index 0) and are cached in a
    bf16 VMEM scratch; every n-tile then runs one (block_b,width)@(width,tile_n)
    MXU matmul for its slab of the final layer.

    NOTE: correctness of the hidden cache relies on the n axis being the LAST
    grid axis and marked "arbitrary" (sequential per core) -- do not reorder.
    """
    x_ref = refs[0]
    param_refs = refs[1:1 + 2 * num_layers]
    o_ref = refs[1 + 2 * num_layers]
    h_ref = refs[2 + 2 * num_layers]

    @pl.when(pl.program_id(1) == 0)
    def _compute_hidden():
        h = x_ref[...]
        for layer in range(num_layers - 1):
            w = param_refs[2 * layer][...]
            b = param_refs[2 * layer + 1][...]
            acc = jnp.dot(h.astype(w.dtype), w,
                          preferred_element_type=jnp.float32) + b.astype(jnp.float32)
            h = jnp.maximum(acc, 0.0).astype(h_ref.dtype)
        h_ref[...] = h.astype(h_ref.dtype)

    w_last = param_refs[2 * (num_layers - 1)][...]
    b_last = param_refs[2 * (num_layers - 1) + 1][...]
    out = jnp.dot(h_ref[...].astype(w_last.dtype), w_last,
                  preferred_element_type=jnp.float32) + b_last.astype(jnp.float32)
    o_ref[...] = out.astype(o_ref.dtype)


# ----------------------------------------------------------------------------
# Wrapper
# ----------------------------------------------------------------------------
def mapnet_forward(x, params, out_size, *, block_b=None, tile_n=None,
                   weight_dtype=jnp.bfloat16, force_tiled=False,
                   last_w_buffers=2, interpret=False):
    """Fused MapNet forward.

    x      : (B, in_features) float32
    params : list of (W (fan_in, fan_out), b (1, fan_out)) float32
             (W is transposed vs torch's (out_features, in_features))
    returns: (B, 1, H, W) float32   (== torch: net(x).reshape(-1, 1, H, W))

    last_w_buffers: pipeline depth for the streamed last-layer weight in the
    n-tiled fallback (bump to 3 on v5e to hide the relatively slower DMA).
    """
    B, in_features = x.shape
    H, W = out_size
    out_dim = H * W
    num_layers = len(params)
    assert num_layers >= 1
    assert params[0][0].shape[0] == in_features
    assert params[-1][0].shape[1] == out_dim

    wbytes = jnp.dtype(weight_dtype).itemsize
    act_dtype = jnp.bfloat16 if wbytes < 4 else jnp.float32
    # TODO(synk): optional float8_e4m3 weight_dtype on v7x (fp8 MXU, ~2x TF/s and
    # half the weight bytes) -- needs an accuracy check; bf16 used everywhere here.

    # ---- pad every layer boundary to a multiple of 128 (exact: zero pads) ----
    dims = [in_features] + [w.shape[1] for (w, _) in params]
    dims_p = [_round_up(d, 128) for d in dims]

    x_p = x.astype(act_dtype)                       # halve input DMA bytes (bf16)
    if dims_p[0] != in_features:
        x_p = jnp.pad(x_p, ((0, 0), (0, dims_p[0] - in_features)))

    padded_params = []
    for li, (w, b) in enumerate(params):
        fi, fo = w.shape
        fi_p, fo_p = dims_p[li], dims_p[li + 1]
        w_p = jnp.pad(w, ((0, fi_p - fi), (0, fo_p - fo))).astype(weight_dtype)
        b_p = jnp.pad(b.reshape(1, -1), ((0, 0), (0, fo_p - fo))).astype(jnp.float32)
        padded_params.append((w_p, b_p))
    out_dim_p = dims_p[-1]
    last_fan_in_p = dims_p[-2]

    # ---- batch tiling ---------------------------------------------------------
    B8 = _round_up(B, 8)
    if block_b is None:
        block_b = _pick_block_b(B8)
    assert block_b % 8 == 0, "block_b must be a multiple of 8"

    weight_bufs = 1 if _HAS_BUFFERED else 2         # constant blocks: 1 buffer if supported
    budget = _vmem_budget_bytes()

    # ---- choose resident (preferred) vs n-tiled last layer ---------------------
    use_resident = not force_tiled
    if use_resident:
        bb = block_b
        while (_resident_footprint(bb, dims_p, wbytes, weight_bufs) > budget
               and bb > 64):
            bb = max(64, _round_up(bb // 2, 16))
        if _resident_footprint(bb, dims_p, wbytes, weight_bufs) <= budget:
            block_b = bb
        else:
            use_resident = False                    # W_last too big: n-tile it

    flat_inputs = [x_p]
    for (w_p, b_p) in padded_params:
        flat_inputs += [w_p, b_p]

    const_kw = dict(pipeline_mode=pl.Buffered(1)) if _HAS_BUFFERED else {}

    if use_resident:
        # -------------------- fully VMEM-resident path -------------------------
        B_p = _round_up(B8, block_b)
        if B_p != x_p.shape[0]:
            x_p = jnp.pad(x_p, ((0, B_p - x_p.shape[0]), (0, 0)))
            flat_inputs[0] = x_p

        in_specs = [pl.BlockSpec((block_b, dims_p[0]), lambda i: (i, 0))]
        for (w_p, b_p) in padded_params:
            in_specs.append(pl.BlockSpec(w_p.shape, lambda i: (0, 0), **const_kw))
            in_specs.append(pl.BlockSpec(b_p.shape, lambda i: (0, 0), **const_kw))
        out_spec = pl.BlockSpec((block_b, out_dim_p), lambda i: (i, 0))

        footprint = _resident_footprint(block_b, dims_p, wbytes, weight_bufs)
        vmem_limit = int(min(budget, max(footprint + (8 << 20), 32 << 20)))

        y = pl.pallas_call(
            functools.partial(_mapnet_resident_kernel, num_layers=num_layers),
            out_shape=jax.ShapeDtypeStruct((B_p, out_dim_p), jnp.float32),
            grid=(B_p // block_b,),
            in_specs=in_specs,
            out_specs=out_spec,
            compiler_params=pltpu.CompilerParams(
                dimension_semantics=("parallel",),
                vmem_limit_bytes=vmem_limit),
            interpret=interpret,
        )(*flat_inputs)
    else:
        # -------------------- n-tiled fallback (very large H*W) ----------------
        if tile_n is None:
            tile_n = _pick_tile_n(out_dim_p, max_tile=512)
        assert tile_n % 128 == 0 and out_dim_p % tile_n == 0

        bb = block_b
        while (_tiled_footprint(bb, tile_n, dims_p, wbytes, weight_bufs,
                                last_w_buffers) > budget and bb > 64):
            bb = max(64, _round_up(bb // 2, 16))
        block_b = bb

        B_p = _round_up(B8, block_b)
        if B_p != x_p.shape[0]:
            x_p = jnp.pad(x_p, ((0, B_p - x_p.shape[0]), (0, 0)))
            flat_inputs[0] = x_p

        last_kw = {}
        if _HAS_BUFFERED and last_w_buffers != 2:
            last_kw = dict(pipeline_mode=pl.Buffered(last_w_buffers))

        in_specs = [pl.BlockSpec((block_b, dims_p[0]), lambda i, j: (i, 0))]
        for li, (w_p, b_p) in enumerate(padded_params):
            if li != num_layers - 1:
                in_specs.append(pl.BlockSpec(w_p.shape, lambda i, j: (0, 0), **const_kw))
                in_specs.append(pl.BlockSpec(b_p.shape, lambda i, j: (0, 0), **const_kw))
            else:
                in_specs.append(pl.BlockSpec((last_fan_in_p, tile_n),
                                             lambda i, j: (0, j), **last_kw))
                in_specs.append(pl.BlockSpec((1, tile_n),
                                             lambda i, j: (0, j), **last_kw))
        out_spec = pl.BlockSpec((block_b, tile_n), lambda i, j: (i, j))

        footprint = _tiled_footprint(block_b, tile_n, dims_p, wbytes,
                                     weight_bufs, last_w_buffers)
        vmem_limit = int(min(budget, max(footprint + (8 << 20), 32 << 20)))

        # Hidden-activation cache correctness requires batch axis first
        # ("parallel") and the n axis last ("arbitrary", sequential per core).
        y = pl.pallas_call(
            functools.partial(_mapnet_tiled_kernel, num_layers=num_layers),
            out_shape=jax.ShapeDtypeStruct((B_p, out_dim_p), jnp.float32),
            grid=(B_p // block_b, out_dim_p // tile_n),
            in_specs=in_specs,
            out_specs=out_spec,
            scratch_shapes=[pltpu.VMEM((block_b, last_fan_in_p), act_dtype)],
            compiler_params=pltpu.CompilerParams(
                dimension_semantics=("parallel", "arbitrary"),
                vmem_limit_bytes=vmem_limit),
            interpret=interpret,
        )(*flat_inputs)

    return y[:B, :out_dim].reshape(-1, 1, H, W)


# ----------------------------------------------------------------------------
# Params + reference
# ----------------------------------------------------------------------------
def init_mapnet_params(key, in_features, out_size, width=128, hidden_layers=1):
    """torch.nn.Linear-style init: uniform(-1/sqrt(fan_in), +1/sqrt(fan_in))."""
    dims = [in_features] + [width] * hidden_layers + [out_size[0] * out_size[1]]
    params = []
    for i in range(len(dims) - 1):
        fan_in, fan_out = dims[i], dims[i + 1]
        key, kw, kb = jax.random.split(key, 3)
        bound = 1.0 / math.sqrt(fan_in)
        w = jax.random.uniform(kw, (fan_in, fan_out), jnp.float32, -bound, bound)
        b = jax.random.uniform(kb, (1, fan_out), jnp.float32, -bound, bound)
        params.append((w, b))
    return params


def _reference_forward(x, params, out_size, weight_dtype=jnp.bfloat16):
    """Pure-JAX reference mirroring the kernel numerics (bf16 weights/activations
    at the MXU, f32 accumulation, f32 bias add / ReLU)."""
    h = x.astype(jnp.float32)
    n = len(params)
    for i, (w, b) in enumerate(params):
        h = jnp.dot(h.astype(weight_dtype), w.astype(weight_dtype),
                    preferred_element_type=jnp.float32) + b.reshape(1, -1).astype(jnp.float32)
        if i != n - 1:
            h = jnp.maximum(h, 0.0)
    return h.reshape(-1, 1, out_size[0], out_size[1])


if __name__ == "__main__":
    key = jax.random.PRNGKey(0)
    kx, kp = jax.random.split(key)

    # Small shapes consistent with MapNet.forward: x (B, in_features) -> (B, 1, H, W)
    B = 64
    in_features = 32       # padded to 128 inside the wrapper
    width = 128            # torch default 512, scaled down for the synthetic test
    hidden_layers = 2      # 3 Linear layers total
    out_size = (20, 20)    # out_dim = 400 -> padded to 512

    x = jax.random.normal(kx, (B, in_features), jnp.float32)
    params = init_mapnet_params(kp, in_features, out_size, width, hidden_layers)
    y_ref = _reference_forward(x, params, out_size)

    # Default path: whole MLP (incl. last layer) VMEM-resident, grid=(batch_tiles,).
    y = jax.block_until_ready(mapnet_forward(x, params, out_size))
    assert y.shape == (B, 1, out_size[0], out_size[1]), y.shape
    err = float(jnp.max(jnp.abs(y - y_ref)))
    assert jnp.allclose(y, y_ref, atol=1e-2, rtol=1e-2), err

    # n-tiled fallback path (used automatically when H*W is too large for residency).
    y2 = jax.block_until_ready(
        mapnet_forward(x, params, out_size, force_tiled=True, tile_n=256))
    err2 = float(jnp.max(jnp.abs(y2 - y_ref)))
    assert jnp.allclose(y2, y_ref, atol=1e-2, rtol=1e-2), err2

    print("KERNEL_OK")
</pallas_src>

<mosaic_0001>
module attributes {stable_mosaic.version = 11 : i64} {
  func.func @_mapnet_resident_kernel(%arg0: i32, %arg1: memref<64x128xbf16, #tpu.memory_space<vmem>>, %arg2: memref<128x128xbf16, #tpu.memory_space<vmem>>, %arg3: memref<1x128xf32, #tpu.memory_space<vmem>>, %arg4: memref<128x128xbf16, #tpu.memory_space<vmem>>, %arg5: memref<1x128xf32, #tpu.memory_space<vmem>>, %arg6: memref<128x512xbf16, #tpu.memory_space<vmem>>, %arg7: memref<1x512xf32, #tpu.memory_space<vmem>>, %arg8: memref<64x512xf32, #tpu.memory_space<vmem>>) attributes {dimension_semantics = [#tpu.dimension_semantics<parallel>], iteration_bounds = array<i64: 1>, scalar_prefetch = 0 : i64, scratch_operands = 0 : i64, tpu.core_type = #tpu.core_type<tc>, window_params = [{transform_indices = @transform_0, window_bounds = array<i64: 64, 128>}, {pipeline_mode = #tpu.pipeline_mode<synchronous>, transform_indices = @transform_1, window_bounds = array<i64: 128, 128>}, {pipeline_mode = #tpu.pipeline_mode<synchronous>, transform_indices = @transform_2, window_bounds = array<i64: 1, 128>}, {pipeline_mode = #tpu.pipeline_mode<synchronous>, transform_indices = @transform_3, window_bounds = array<i64: 128, 128>}, {pipeline_mode = #tpu.pipeline_mode<synchronous>, transform_indices = @transform_4, window_bounds = array<i64: 1, 128>}, {pipeline_mode = #tpu.pipeline_mode<synchronous>, transform_indices = @transform_5, window_bounds = array<i64: 128, 512>}, {pipeline_mode = #tpu.pipeline_mode<synchronous>, transform_indices = @transform_6, window_bounds = array<i64: 1, 512>}, {transform_indices = @transform_7, window_bounds = array<i64: 64, 512>}]} {
    %c0 = arith.constant 0 : index
    %c0_0 = arith.constant 0 : index
    %0 = vector.load %arg1[%c0, %c0_0] : memref<64x128xbf16, #tpu.memory_space<vmem>>, vector<64x128xbf16>
    %c0_1 = arith.constant 0 : index
    %c0_2 = arith.constant 0 : index
    %1 = vector.load %arg2[%c0_1, %c0_2] : memref<128x128xbf16, #tpu.memory_space<vmem>>, vector<128x128xbf16>
    %c0_3 = arith.constant 0 : index
    %c0_4 = arith.constant 0 : index
    %2 = vector.load %arg3[%c0_3, %c0_4] : memref<1x128xf32, #tpu.memory_space<vmem>>, vector<1x128xf32>
    %cst = arith.constant dense<0.000000e+00> : vector<64x128xf32>
    %3 = tpu.matmul %0, %1, %cst {dimension_numbers = #tpu.dot_dimension_numbers<[1], [0], [0], [1], [0, 0, 1, 1], [], []>} : vector<64x128xbf16>, vector<128x128xbf16>, vector<64x128xf32> -> vector<64x128xf32>
    %4 = vector.broadcast %2 : vector<1x128xf32> to vector<64x128xf32>
    %5 = arith.addf %3, %4 : vector<64x128xf32>
    %cst_5 = arith.constant 0.000000e+00 : f32
    %6 = vector.broadcast %cst_5 : f32 to vector<64x128xf32>
    %7 = arith.maximumf %5, %6 : vector<64x128xf32>
    %8 = arith.truncf %7 : vector<64x128xf32> to vector<64x128xbf16>
    %c0_6 = arith.constant 0 : index
    %c0_7 = arith.constant 0 : index
    %9 = vector.load %arg4[%c0_6, %c0_7] : memref<128x128xbf16, #tpu.memory_space<vmem>>, vector<128x128xbf16>
    %c0_8 = arith.constant 0 : index
    %c0_9 = arith.constant 0 : index
    %10 = vector.load %arg5[%c0_8, %c0_9] : memref<1x128xf32, #tpu.memory_space<vmem>>, vector<1x128xf32>
    %cst_10 = arith.constant dense<0.000000e+00> : vector<64x128xf32>
    %11 = tpu.matmul %8, %9, %cst_10 {dimension_numbers = #tpu.dot_dimension_numbers<[1], [0], [0], [1], [0, 0, 1, 1], [], []>} : vector<64x128xbf16>, vector<128x128xbf16>, vector<64x128xf32> -> vector<64x128xf32>
    %12 = vector.broadcast %10 : vector<1x128xf32> to vector<64x128xf32>
    %13 = arith.addf %11, %12 : vector<64x128xf32>
    %cst_11 = arith.constant 0.000000e+00 : f32
    %14 = vector.broadcast %cst_11 : f32 to vector<64x128xf32>
    %15 = arith.maximumf %13, %14 : vector<64x128xf32>
    %16 = arith.truncf %15 : vector<64x128xf32> to vector<64x128xbf16>
    %c0_12 = arith.constant 0 : index
    %c0_13 = arith.constant 0 : index
    %17 = vector.load %arg6[%c0_12, %c0_13] : memref<128x512xbf16, #tpu.memory_space<vmem>>, vector<128x512xbf16>
    %c0_14 = arith.constant 0 : index
    %c0_15 = arith.constant 0 : index
    %18 = vector.load %arg7[%c0_14, %c0_15] : memref<1x512xf32, #tpu.memory_space<vmem>>, vector<1x512xf32>
    %cst_16 = arith.constant dense<0.000000e+00> : vector<64x512xf32>
    %19 = tpu.matmul %16, %17, %cst_16 {dimension_numbers = #tpu.dot_dimension_numbers<[1], [0], [0], [1], [0, 0, 1, 1], [], []>} : vector<64x128xbf16>, vector<128x512xbf16>, vector<64x512xf32> -> vector<64x512xf32>
    %20 = vector.broadcast %18 : vector<1x512xf32> to vector<64x512xf32>
    %21 = arith.addf %19, %20 : vector<64x512xf32>
    %c0_17 = arith.constant 0 : index
    %c0_18 = arith.constant 0 : index
    %22 = vector.load %arg8[%c0_17, %c0_18] : memref<64x512xf32, #tpu.memory_space<vmem>>, vector<64x512xf32>
    tpu.vector_store %arg8[%c0_17, %c0_18], %21 {strides = array<i32>} : memref<64x512xf32, #tpu.memory_space<vmem>>, vector<64x512xf32>,
    return
  }
  func.func @transform_0(%arg0: i32) -> (i32, i32) {
    %c0_i32 = arith.constant 0 : i32
    %c0_i32_0 = arith.constant 0 : i32
    return %arg0, %c0_i32 : i32, i32
  }
  func.func @transform_1(%arg0: i32) -> (i32, i32) {
    %c0_i32 = arith.constant 0 : i32
    %c0_i32_0 = arith.constant 0 : i32
    %c0_i32_1 = arith.constant 0 : i32
    return %c0_i32, %c0_i32_0 : i32, i32
  }
  func.func @transform_2(%arg0: i32) -> (i32, i32) {
    %c0_i32 = arith.constant 0 : i32
    %c0_i32_0 = arith.constant 0 : i32
    %c0_i32_1 = arith.constant 0 : i32
    return %c0_i32, %c0_i32_0 : i32, i32
  }
  func.func @transform_3(%arg0: i32) -> (i32, i32) {
    %c0_i32 = arith.constant 0 : i32
    %c0_i32_0 = arith.constant 0 : i32
    %c0_i32_1 = arith.constant 0 : i32
    return %c0_i32, %c0_i32_0 : i32, i32
  }
  func.func @transform_4(%arg0: i32) -> (i32, i32) {
    %c0_i32 = arith.constant 0 : i32
    %c0_i32_0 = arith.constant 0 : i32
    %c0_i32_1 = arith.constant 0 : i32
    return %c0_i32, %c0_i32_0 : i32, i32
  }
  func.func @transform_5(%arg0: i32) -> (i32, i32) {
    %c0_i32 = arith.constant 0 : i32
    %c0_i32_0 = arith.constant 0 : i32
    %c0_i32_1 = arith.constant 0 : i32
    return %c0_i32, %c0_i32_0 : i32, i32
  }
  func.func @transform_6(%arg0: i32) -> (i32, i32) {
    %c0_i32 = arith.constant 0 : i32
    %c0_i32_0 = arith.constant 0 : i32
    %c0_i32_1 = arith.constant 0 : i32
    return %c0_i32, %c0_i32_0 : i32, i32
  }
  func.func @transform_7(%arg0: i32) -> (i32, i32) {
    %c0_i32 = arith.constant 0 : i32
    %c0_i32_0 = arith.constant 0 : i32
    return %arg0, %c0_i32 : i32, i32
  }
}

</mosaic_0001>

<llo_original>
// kernel: tpu_custom_call.1
$region0: #{tpu_custom_call.1}
  #allocation0 [shape = 'u32[]', space=smem, size = 0x4, offset = 0x4, fixed_abs, tag = 'smem constant byte address 0x4 - core index']
  #allocation1 [shape = 'u32[144,128]{1,0:T(1,128)}', space=vmem, size = 0x12000, scoped, tag = 'internal scratch']
  %s0 = inlined_call_operand.hbm [shape: bf16[64,128], index: 0, kind: input, shape index: {}]
  %s1 = inlined_call_operand.hbm [shape: bf16[128,128], index: 1, kind: input, shape index: {}]
  %s2 = inlined_call_operand.vmem [shape: f32[1,128], index: 2, kind: input, shape index: {}]
  %s3 = inlined_call_operand.hbm [shape: bf16[128,128], index: 3, kind: input, shape index: {}]
  %s4 = inlined_call_operand.vmem [shape: f32[1,128], index: 4, kind: input, shape index: {}]
  %s5 = inlined_call_operand.hbm [shape: bf16[128,512], index: 5, kind: input, shape index: {}]
  %s6 = inlined_call_operand.vmem [shape: f32[1,512], index: 6, kind: input, shape index: {}]
  %s7 = inlined_call_operand.hbm [shape: f32[64,512], index: 7, kind: output, shape index: {}]
  %s8 = sld [smem:[#allocation0]]
  $region54: #{tpu_custom_call.1} parent=0
    _
  %s10 = ssub.s32 1, %s8
  %s11 = scalar_select 0, %s10, %s8
  $region1: #{tpu_custom_call.1} parent=0
    #allocation2 [shape = 'u8[16384]{0}', space=vmem, size = 0x4000, scoped, tag = 'input window, operand 0, single buffered']
    #allocation3 [shape = 's32[1]{0}', space=sflag, size = 0x4, scoped, tag = 'scoped memory for tpu_custom_call.1']
    #allocation4 [shape = 's32[1]{0}', space=sflag, size = 0x4, scoped, tag = 'scoped memory for tpu_custom_call.1']
    #allocation5 [shape = 'u8[32768]{0}', space=vmem, size = 0x8000, scoped, tag = 'input window, operand 1, single buffered']
    #allocation6 [shape = 's32[1]{0}', space=sflag, size = 0x4, scoped, tag = 'scoped memory for tpu_custom_call.1']
    #allocation7 [shape = 'u8[32768]{0}', space=vmem, size = 0x8000, scoped, tag = 'input window, operand 3, single buffered']
    #allocation8 [shape = 'u8[131072]{0}', space=vmem, size = 0x20000, scoped, tag = 'input window, operand 5, single buffered']
    #allocation9 [shape = 's32[1]{0}', space=sflag, size = 0x4, scoped, tag = 'scoped memory for tpu_custom_call.1']
    #allocation10 [shape = 'u8[131072]{0}', space=vmem, size = 0x20000, scoped, tag = 'output window, operand 0, single buffered']
    %12 = vsyncpa [#allocation3], 0
    %13 = vsyncpa [#allocation6], 0
    %14 = vsyncpa [#allocation9], 0
    %15 = vsyncpa [#allocation4], 0
    // Predicated region
    $region2: #{tpu_custom_call.1} parent=1 // pred_check
      _
    $region3: #{tpu_custom_call.1} parent=1 // pred_check_branch
      %17 = sbr.rel (0) target = $region5
    $region4: #{tpu_custom_call.1} parent=1 // pred_region
      %s19 = ssub.s32 512, 512
      %20 = vsyncadd [#allocation3], %s19
      %s21 = sshll.u32 [#allocation2], 4
      %s22 = int_to_ptr.vmem [resolvable:$true] %s21
      %27 = dma.hbm_to_vmem [thread:$0]  %s0, 512, %s22, [#allocation3], 64, 64, 4
    $region5: #{tpu_custom_call.1} parent=1 // pred_fallthru
      _
    // Predicated region
    $region6: #{tpu_custom_call.1} parent=1 // pred_check
      _
    $region7: #{tpu_custom_call.1} parent=1 // pred_check_branch
      %29 = sbr.rel (0) target = $region9
    $region8: #{tpu_custom_call.1} parent=1 // pred_region
      %s31 = ssub.s32 1024, 1024
      %32 = vsyncadd [#allocation6], %s31
      %s33 = sshll.u32 [#allocation5], 4
      %s34 = int_to_ptr.vmem [resolvable:$true] %s33
      %39 = dma.hbm_to_vmem [thread:$0]  %s1, 1024, %s34, [#allocation6], 64, 64, 4
    $region9: #{tpu_custom_call.1} parent=1 // pred_fallthru
      _
    // Predicated region
    $region10: #{tpu_custom_call.1} parent=1 // pred_check
      _
    $region11: #{tpu_custom_call.1} parent=1 // pred_check_branch
      %41 = sbr.rel (0) target = $region13
    $region12: #{tpu_custom_call.1} parent=1 // pred_region
      _
    $region13: #{tpu_custom_call.1} parent=1 // pred_fallthru
      _
    // Predicated region
    $region14: #{tpu_custom_call.1} parent=1 // pred_check
      _
    $region15: #{tpu_custom_call.1} parent=1 // pred_check_branch
      %43 = sbr.rel (0) target = $region17
    $region16: #{tpu_custom_call.1} parent=1 // pred_region
      %s45 = ssub.s32 1024, 1024
      %46 = vsyncadd [#allocation6], %s45
      %s47 = sshll.u32 [#allocation7], 4
      %s48 = int_to_ptr.vmem [resolvable:$true] %s47
      %53 = dma.hbm_to_vmem [thread:$0]  %s3, 1024, %s48, [#allocation6], 64, 64, 4
    $region17: #{tpu_custom_call.1} parent=1 // pred_fallthru
      _
    // Predicated region
    $region18: #{tpu_custom_call.1} parent=1 // pred_check
      _
    $region19: #{tpu_custom_call.1} parent=1 // pred_check_branch
      %55 = sbr.rel (0) target = $region21
    $region20: #{tpu_custom_call.1} parent=1 // pred_region
      _
    $region21: #{tpu_custom_call.1} parent=1 // pred_fallthru
      _
    // Predicated region
    $region22: #{tpu_custom_call.1} parent=1 // pred_check
      _
    $region23: #{tpu_custom_call.1} parent=1 // pred_check_branch
      %57 = sbr.rel (0) target = $region25
    $region24: #{tpu_custom_call.1} parent=1 // pred_region
      %s59 = ssub.s32 4096, 4096
      %60 = vsyncadd [#allocation9], %s59
      %s61 = sshll.u32 [#allocation8], 4
      %s62 = int_to_ptr.vmem [resolvable:$true] %s61
      %67 = dma.hbm_to_vmem [thread:$0]  %s5, 4096, %s62, [#allocation9], 256, 256, 16
    $region25: #{tpu_custom_call.1} parent=1 // pred_fallthru
      _
    // Predicated region
    $region26: #{tpu_custom_call.1} parent=1 // pred_check
      _
    $region27: #{tpu_custom_call.1} parent=1 // pred_check_branch
      %69 = sbr.rel (0) target = $region29
    $region28: #{tpu_custom_call.1} parent=1 // pred_region
      _
    $region29: #{tpu_custom_call.1} parent=1 // pred_fallthru
      _
    // Predicated region
    $region30: #{tpu_custom_call.1} parent=1 // pred_check
      _
    $region31: #{tpu_custom_call.1} parent=1 // pred_check_branch
      %71 = sbr.rel (0) target = $region33
    $region32: #{tpu_custom_call.1} parent=1 // pred_region
      %72 = dma.done [#allocation3], 512
    $region33: #{tpu_custom_call.1} parent=1 // pred_fallthru
      _
    // Predicated region
    $region34: #{tpu_custom_call.1} parent=1 // pred_check
      _
    $region35: #{tpu_custom_call.1} parent=1 // pred_check_branch
      %74 = sbr.rel (0) target = $region37
    $region36: #{tpu_custom_call.1} parent=1 // pred_region
      %75 = dma.done [#allocation6], 1024
    $region37: #{tpu_custom_call.1} parent=1 // pred_fallthru
      _
    // Predicated region
    $region38: #{tpu_custom_call.1} parent=1 // pred_check
      _
    $region39: #{tpu_custom_call.1} parent=1 // pred_check_branch
      %77 = sbr.rel (0) target = $region41
    $region40: #{tpu_custom_call.1} parent=1 // pred_region
      %78 = dma.done [#allocation6], 1024
    $region41: #{tpu_custom_call.1} parent=1 // pred_fallthru
      _
    // Predicated region
    $region42: #{tpu_custom_call.1} parent=1 // pred_check
      _
    $region43: #{tpu_custom_call.1} parent=1 // pred_check_branch
      %80 = sbr.rel (0) target = $region45
    $region44: #{tpu_custom_call.1} parent=1 // pred_region
      %81 = dma.done [#allocation9], 4096
    $region45: #{tpu_custom_call.1} parent=1 // pred_fallthru
      _
    %v83 = vld [vmem:[#allocation2] sm:$0xf]
    %v84 = vld [vmem:[#allocation2 + $0x4] sm:$0xf]
    %v85 = vld [vmem:[#allocation2 + $0x8] sm:$0xf]
    %v86 = vld [vmem:[#allocation2 + $0xc] sm:$0xf]
    %v87 = vld [vmem:[#allocation2 + $0x10] sm:$0xf]
    %v88 = vld [vmem:[#allocation2 + $0x14] sm:$0xf]
    %v89 = vld [vmem:[#allocation2 + $0x18] sm:$0xf]
    %v90 = vld [vmem:[#allocation2 + $0x1c] sm:$0xf]
    %v91 = vld [vmem:[#allocation5] sm:$0xf]
    %v92 = vld [vmem:[#allocation5 + $0x4] sm:$0xf]
    %v93 = vld [vmem:[#allocation5 + $0x8] sm:$0xf]
    %v94 = vld [vmem:[#allocation5 + $0xc] sm:$0xf]
    %v95 = vld [vmem:[#allocation5 + $0x10] sm:$0xf]
    %v96 = vld [vmem:[#allocation5 + $0x14] sm:$0xf]
    %v97 = vld [vmem:[#allocation5 + $0x18] sm:$0xf]
    %v98 = vld [vmem:[#allocation5 + $0x1c] sm:$0xf]
    %v99 = vld [vmem:[#allocation5 + $0x20] sm:$0xf]
    %v100 = vld [vmem:[#allocation5 + $0x24] sm:$0xf]
    %v101 = vld [vmem:[#allocation5 + $0x28] sm:$0xf]
    %v102 = vld [vmem:[#allocation5 + $0x2c] sm:$0xf]
    %v103 = vld [vmem:[#allocation5 + $0x30] sm:$0xf]
    %v104 = vld [vmem:[#allocation5 + $0x34] sm:$0xf]
    %v105 = vld [vmem:[#allocation5 + $0x38] sm:$0xf]
    %v106 = vld [vmem:[#allocation5 + $0x3c] sm:$0xf]
    %v107 = vld [vmem:[%s2] sm:$0x1]
    %v109 = vlaneseq
    %v110 = vshrl.u32 %v109, 7
    %v111 = vsub.s32 0, %v110
    %v112 = vrot.slane %v107, %v111
    %v122 = vunpack.c.l.b16 %v83
    %v123 = vunpack.c.l.b16 %v84
    %v124 = vunpack.c.l.b16 %v85
    %v125 = vunpack.c.l.b16 %v86
    %v126 = vunpack.c.l.b16 %v87
    %v127 = vunpack.c.l.b16 %v88
    %v128 = vunpack.c.l.b16 %v89
    %v129 = vunpack.c.l.b16 %v90
    %v130 = vpack.c.b16 %v123, %v122
    %v131 = vpack.c.b16 %v125, %v124
    %v132 = vpack.c.b16 %v127, %v126
    %v133 = vpack.c.b16 %v129, %v128
    %v154 = vunpack.c.l.b16 %v91
    %v155 = vunpack.c.l.b16 %v92
    %v156 = vunpack.c.l.b16 %v93
    %v157 = vunpack.c.l.b16 %v94
    %v158 = vunpack.c.l.b16 %v95
    %v159 = vunpack.c.l.b16 %v96
    %v160 = vunpack.c.l.b16 %v97
    %v161 = vunpack.c.l.b16 %v98
    %v162 = vunpack.c.l.b16 %v99
    %v163 = vunpack.c.l.b16 %v100
    %v164 = vunpack.c.l.b16 %v101
    %v165 = vunpack.c.l.b16 %v102
    %v166 = vunpack.c.l.b16 %v103
    %v167 = vunpack.c.l.b16 %v104
    %v168 = vunpack.c.l.b16 %v105
    %v169 = vunpack.c.l.b16 %v106
    %v170 = vpack.c.b16 %v155, %v154
    %v171 = vpack.c.b16 %v157, %v156
    %v172 = vpack.c.b16 %v159, %v158
    %v173 = vpack.c.b16 %v161, %v160
    %v174 = vpack.c.b16 %v163, %v162
    %v175 = vpack.c.b16 %v165, %v164
    %v176 = vpack.c.b16 %v167, %v166
    %v177 = vpack.c.b16 %v169, %v168
    %186 = vmatprep.subr.bf16.mxu0 0
    %187 = vmatpush1.bf16.msra.mxu0 %v177
    %188 = vmatprep.subr.bf16.mxu0 0
    %189 = vmatpush1.bf16.msra.mxu0 %v176
    %190 = vmatprep.subr.bf16.mxu0 0
    %191 = vmatpush1.bf16.msra.mxu0 %v175
    %192 = vmatprep.subr.bf16.mxu0 0
    %193 = vmatpush1.bf16.msra.mxu0 %v174
    %194 = vmatprep.subr.bf16.mxu0 0
    %195 = vmatpush1.bf16.msra.mxu0 %v173
    %196 = vmatprep.subr.bf16.mxu0 0
    %197 = vmatpush1.bf16.msra.mxu0 %v172
    %198 = vmatprep.subr.bf16.mxu0 0
    %199 = vmatpush1.bf16.msra.mxu0 %v171
    %200 = vmatprep.subr.bf16.mxu0 0
    %201 = vmatpush1.bf16.msra.mxu0 %v170
    %202 = vmatprep.subr.bf16.mxu0 0
    %203 = vmatpush2.bf16.msra.mxu0 0
    %204 = vmatprep.subr.bf16.mxu0 0
    %205 = vmatpush2.bf16.msra.mxu0 0
    %206 = vmatprep.subr.bf16.mxu0 0
    %207 = vmatpush2.bf16.msra.mxu0 0
    %208 = vmatprep.subr.bf16.mxu0 0
    %209 = vmatpush2.bf16.msra.mxu0 0
    %210 = vmatprep.subr.bf16.mxu0 0
    %211 = vmatpush2.bf16.msra.mxu0 0
    %212 = vmatprep.subr.bf16.mxu0 0
    %213 = vmatpush2.bf16.msra.mxu0 0
    %214 = vmatprep.subr.bf16.mxu0 0
    %215 = vmatpush2.bf16.msra.mxu0 0
    %216 = vmatprep.subr.bf16.mxu0 0
    %217 = vmatpush2.bf16.msra.mxu0 0
    %218 = vmatprep.mubr.bf16.mxu0 0
    %219 = vmatmul.mubr.bf16.gmra.mxu0 %v130
    %v220 = vpop.f32.mrf.mxu0
    %v221 = vadd.f32 %v112, %v220
    %v222 = vpop.f32.mrf.mxu0
    %v223 = vpop.f32.mrf.mxu0
    %v224 = vadd.f32 %v112, %v223
    %v225 = vpop.f32.mrf.mxu0
    %226 = vmatprep.mubr.bf16.mxu0 0
    %227 = vmatmul.mubr.bf16.gmra.mxu0 %v131
    %v228 = vpop.f32.mrf.mxu0
    %v229 = vadd.f32 %v112, %v228
    %v230 = vpop.f32.mrf.mxu0
    %v231 = vpop.f32.mrf.mxu0
    %v232 = vadd.f32 %v112, %v231
    %v233 = vpop.f32.mrf.mxu0
    %234 = vmatprep.mubr.bf16.mxu0 0
    %235 = vmatmul.mubr.bf16.gmra.mxu0 %v132
    %v236 = vpop.f32.mrf.mxu0
    %v237 = vadd.f32 %v112, %v236
    %v238 = vpop.f32.mrf.mxu0
    %v239 = vpop.f32.mrf.mxu0
    %v240 = vadd.f32 %v112, %v239
    %v241 = vpop.f32.mrf.mxu0
    %242 = vmatprep.mubr.bf16.mxu0 0
    %243 = vmatmul.mubr.bf16.gmra.mxu0 %v133
    %v244 = vpop.f32.mrf.mxu0
    %v245 = vadd.f32 %v112, %v244
    %v246 = vpop.f32.mrf.mxu0
    %v247 = vpop.f32.mrf.mxu0
    %v248 = vadd.f32 %v112, %v247
    %v249 = vpop.f32.mrf.mxu0
    %250 = vdwg.mxu0
    %v251 = vmax.f32 %v221, 0.0
    %v252 = vmax.f32 %v224, 0.0
    %v253 = vmax.f32 %v229, 0.0
    %v254 = vmax.f32 %v232, 0.0
    %v255 = vmax.f32 %v237, 0.0
    %v256 = vmax.f32 %v240, 0.0
    %v257 = vmax.f32 %v245, 0.0
    %v258 = vmax.f32 %v248, 0.0
    %v259 = vpack.c.bf16 %v252, %v251
    %v260 = vpack.c.bf16 %v254, %v253
    %v261 = vpack.c.bf16 %v256, %v255
    %v262 = vpack.c.bf16 %v258, %v257
    %v263 = vld [vmem:[#allocation7] sm:$0xf]
    %v264 = vld [vmem:[#allocation7 + $0x4] sm:$0xf]
    %v265 = vld [vmem:[#allocation7 + $0x8] sm:$0xf]
    %v266 = vld [vmem:[#allocation7 + $0xc] sm:$0xf]
    %v267 = vld [vmem:[#allocation7 + $0x10] sm:$0xf]
    %v268 = vld [vmem:[#allocation7 + $0x14] sm:$0xf]
    %v269 = vld [vmem:[#allocation7 + $0x18] sm:$0xf]
    %v270 = vld [vmem:[#allocation7 + $0x1c] sm:$0xf]
    %v271 = vld [vmem:[#allocation7 + $0x20] sm:$0xf]
    %v272 = vld [vmem:[#allocation7 + $0x24] sm:$0xf]
    %v273 = vld [vmem:[#allocation7 + $0x28] sm:$0xf]
    %v274 = vld [vmem:[#allocation7 + $0x2c] sm:$0xf]
    %v275 = vld [vmem:[#allocation7 + $0x30] sm:$0xf]
    %v276 = vld [vmem:[#allocation7 + $0x34] sm:$0xf]
    %v277 = vld [vmem:[#allocation7 + $0x38] sm:$0xf]
    %v278 = vld [vmem:[#allocation7 + $0x3c] sm:$0xf]
    %v279 = vld [vmem:[%s4] sm:$0x1]
    %v281 = vlaneseq
    %v282 = vshrl.u32 %v281, 7
    %v283 = vsub.s32 0, %v282
    %v284 = vrot.slane %v279, %v283
    %v302 = vunpack.c.l.b16 %v263
    %v303 = vunpack.c.l.b16 %v264
    %v304 = vunpack.c.l.b16 %v265
    %v305 = vunpack.c.l.b16 %v266
    %v306 = vunpack.c.l.b16 %v267
    %v307 = vunpack.c.l.b16 %v268
    %v308 = vunpack.c.l.b16 %v269
    %v309 = vunpack.c.l.b16 %v270
    %v310 = vunpack.c.l.b16 %v271
    %v311 = vunpack.c.l.b16 %v272
    %v312 = vunpack.c.l.b16 %v273
    %v313 = vunpack.c.l.b16 %v274
    %v314 = vunpack.c.l.b16 %v275
    %v315 = vunpack.c.l.b16 %v276
    %v316 = vunpack.c.l.b16 %v277
    %v317 = vunpack.c.l.b16 %v278
    %v318 = vpack.c.b16 %v303, %v302
    %v319 = vpack.c.b16 %v305, %v304
    %v320 = vpack.c.b16 %v307, %v306
    %v321 = vpack.c.b16 %v309, %v308
    %v322 = vpack.c.b16 %v311, %v310
    %v323 = vpack.c.b16 %v313, %v312
    %v324 = vpack.c.b16 %v315, %v314
    %v325 = vpack.c.b16 %v317, %v316
    %334 = vmatprep.subr.bf16.mxu0 0
    %335 = vmatpush1.bf16.msra.mxu0 %v325
    %336 = vmatprep.subr.bf16.mxu0 0
    %337 = vmatpush1.bf16.msra.mxu0 %v324
    %338 = vmatprep.subr.bf16.mxu0 0
    %339 = vmatpush1.bf16.msra.mxu0 %v323
    %340 = vmatprep.subr.bf16.mxu0 0
    %341 = vmatpush1.bf16.msra.mxu0 %v322
    %342 = vmatprep.subr.bf16.mxu0 0
    %343 = vmatpush1.bf16.msra.mxu0 %v321
    %344 = vmatprep.subr.bf16.mxu0 0
    %345 = vmatpush1.bf16.msra.mxu0 %v320
    %346 = vmatprep.subr.bf16.mxu0 0
    %347 = vmatpush1.bf16.msra.mxu0 %v319
    %348 = vmatprep.subr.bf16.mxu0 0
    %349 = vmatpush1.bf16.msra.mxu0 %v318
    %350 = vmatprep.subr.bf16.mxu0 0
    %351 = vmatpush2.bf16.msra.mxu0 0
    %352 = vmatprep.subr.bf16.mxu0 0
    %353 = vmatpush2.bf16.msra.mxu0 0
    %354 = vmatprep.subr.bf16.mxu0 0
    %355 = vmatpush2.bf16.msra.mxu0 0
    %356 = vmatprep.subr.bf16.mxu0 0
    %357 = vmatpush2.bf16.msra.mxu0 0
    %358 = vmatprep.subr.bf16.mxu0 0
    %359 = vmatpush2.bf16.msra.mxu0 0
    %360 = vmatprep.subr.bf16.mxu0 0
    %361 = vmatpush2.bf16.msra.mxu0 0
    %362 = vmatprep.subr.bf16.mxu0 0
    %363 = vmatpush2.bf16.msra.mxu0 0
    %364 = vmatprep.subr.bf16.mxu0 0
    %365 = vmatpush2.bf16.msra.mxu0 0
    %366 = vmatprep.mubr.bf16.mxu0 0
    %367 = vmatmul.mubr.bf16.gmra.mxu0 %v259
    %v368 = vpop.f32.mrf.mxu0
    %v369 = vadd.f32 %v284, %v368
    %v370 = vpop.f32.mrf.mxu0
    %v371 = vpop.f32.mrf.mxu0
    %v372 = vadd.f32 %v284, %v371
    %v373 = vpop.f32.mrf.mxu0
    %374 = vmatprep.mubr.bf16.mxu0 0
    %375 = vmatmul.mubr.bf16.gmra.mxu0 %v260
    %v376 = vpop.f32.mrf.mxu0
    %v377 = vadd.f32 %v284, %v376
    %v378 = vpop.f32.mrf.mxu0
    %v379 = vpop.f32.mrf.mxu0
    %v380 = vadd.f32 %v284, %v379
    %v381 = vpop.f32.mrf.mxu0
    %382 = vmatprep.mubr.bf16.mxu0 0
    %383 = vmatmul.mubr.bf16.gmra.mxu0 %v261
    %v384 = vpop.f32.mrf.mxu0
    %v385 = vadd.f32 %v284, %v384
    %v386 = vpop.f32.mrf.mxu0
    %v387 = vpop.f32.mrf.mxu0
    %v388 = vadd.f32 %v284, %v387
    %v389 = vpop.f32.mrf.mxu0
    %390 = vmatprep.mubr.bf16.mxu0 0
    %391 = vmatmul.mubr.bf16.gmra.mxu0 %v262
    %v392 = vpop.f32.mrf.mxu0
    %v393 = vadd.f32 %v284, %v392
    %v394 = vpop.f32.mrf.mxu0
    %v395 = vpop.f32.mrf.mxu0
    %v396 = vadd.f32 %v284, %v395
    %v397 = vpop.f32.mrf.mxu0
    %398 = vdwg.mxu0
    %v399 = vmax.f32 %v369, 0.0
    %v400 = vmax.f32 %v372, 0.0
    %v401 = vmax.f32 %v377, 0.0
    %v402 = vmax.f32 %v380, 0.0
    %v403 = vmax.f32 %v385, 0.0
    %v404 = vmax.f32 %v388, 0.0
    %v405 = vmax.f32 %v393, 0.0
    %v406 = vmax.f32 %v396, 0.0
    %v407 = vpack.c.bf16 %v400, %v399
    %v408 = vpack.c.bf16 %v402, %v401
    %v409 = vpack.c.bf16 %v404, %v403
    %v410 = vpack.c.bf16 %v406, %v405
    %v411 = vld [vmem:[#allocation8] sm:$0xff]
    %v412 = vld [vmem:[#allocation8 + $0x8] sm:$0xff]
    %v413 = vld [vmem:[#allocation8 + $0x10] sm:$0xff]
    %v414 = vld [vmem:[#allocation8 + $0x18] sm:$0xff]
    %v415 = vld [vmem:[#allocation8 + $0x20] sm:$0xff]
    %v416 = vld [vmem:[#allocation8 + $0x28] sm:$0xff]
    %v417 = vld [vmem:[#allocation8 + $0x30] sm:$0xff]
    %v418 = vld [vmem:[#allocation8 + $0x38] sm:$0xff]
    %v419 = vld [vmem:[#allocation8 + $0x40] sm:$0xff]
    %v420 = vld [vmem:[#allocation8 + $0x48] sm:$0xff]
    %v421 = vld [vmem:[#allocation8 + $0x50] sm:$0xff]
    %v422 = vld [vmem:[#allocation8 + $0x58] sm:$0xff]
    %v423 = vld [vmem:[#allocation8 + $0x60] sm:$0xff]
    %v424 = vld [vmem:[#allocation8 + $0x68] sm:$0xff]
    %v425 = vld [vmem:[#allocation8 + $0x70] sm:$0xff]
    %v426 = vld [vmem:[#allocation8 + $0x78] sm:$0xff]
    %v427 = vld [vmem:[#allocation8 + $0x80] sm:$0xff]
    %v428 = vld [vmem:[#allocation8 + $0x88] sm:$0xff]
    %v429 = vld [vmem:[#allocation8 + $0x90] sm:$0xff]
    %v430 = vld [vmem:[#allocation8 + $0x98] sm:$0xff]
    %v431 = vld [vmem:[#allocation8 + $0xa0] sm:$0xff]
    %v432 = vld [vmem:[#allocation8 + $0xa8] sm:$0xff]
    %v433 = vld [vmem:[#allocation8 + $0xb0] sm:$0xff]
    %v434 = vld [vmem:[#allocation8 + $0xb8] sm:$0xff]
    %v435 = vld [vmem:[#allocation8 + $0xc0] sm:$0xff]
    %v436 = vld [vmem:[#allocation8 + $0xc8] sm:$0xff]
    %v437 = vld [vmem:[#allocation8 + $0xd0] sm:$0xff]
    %v438 = vld [vmem:[#allocation8 + $0xd8] sm:$0xff]
    %v439 = vld [vmem:[#allocation8 + $0xe0] sm:$0xff]
    %v440 = vld [vmem:[#allocation8 + $0xe8] sm:$0xff]
    %v441 = vld [vmem:[#allocation8 + $0xf0] sm:$0xff]
    %v442 = vld [vmem:[#allocation8 + $0xf8] sm:$0xff]
    %v443 = vld [vmem:[%s6] sm:$0xf]
    %v445 = vlaneseq
    %v446 = vshrl.u32 %v445, 7
    %v447 = vsub.s32 0, %v446
    %v448 = vrot.slane %v443, %v447
    %v449 = vlaneseq
    %v450 = vshrl.u32 %v449, 7
    %v451 = vsub.s32 1, %v450
    %v452 = vrot.slane %v443, %v451
    %v453 = vlaneseq
    %v454 = vshrl.u32 %v453, 7
    %v455 = vsub.s32 2, %v454
    %v456 = vrot.slane %v443, %v455
    %v457 = vlaneseq
    %v458 = vshrl.u32 %v457, 7
    %v459 = vsub.s32 3, %v458
    %v460 = vrot.slane %v443, %v459
    %v497 = vunpack.c.l.b16 %v411
    %v498 = vunpack.c.h.b16 %v411
    %v499 = vunpack.c.l.b16 %v412
    %v500 = vunpack.c.h.b16 %v412
    %v501 = vunpack.c.l.b16 %v413
    %v502 = vunpack.c.h.b16 %v413
    %v503 = vunpack.c.l.b16 %v414
    %v504 = vunpack.c.h.b16 %v414
    %v505 = vunpack.c.l.b16 %v415
    %v506 = vunpack.c.h.b16 %v415
    %v507 = vunpack.c.l.b16 %v416
    %v508 = vunpack.c.h.b16 %v416
    %v509 = vunpack.c.l.b16 %v417
    %v510 = vunpack.c.h.b16 %v417
    %v511 = vunpack.c.l.b16 %v418
    %v512 = vunpack.c.h.b16 %v418
    %v513 = vunpack.c.l.b16 %v419
    %v514 = vunpack.c.h.b16 %v419
    %v515 = vunpack.c.l.b16 %v420
    %v516 = vunpack.c.h.b16 %v420
    %v517 = vunpack.c.l.b16 %v421
    %v518 = vunpack.c.h.b16 %v421
    %v519 = vunpack.c.l.b16 %v422
    %v520 = vunpack.c.h.b16 %v422
    %v521 = vunpack.c.l.b16 %v423
    %v522 = vunpack.c.h.b16 %v423
    %v523 = vunpack.c.l.b16 %v424
    %v524 = vunpack.c.h.b16 %v424
    %v525 = vunpack.c.l.b16 %v425
    %v526 = vunpack.c.h.b16 %v425
    %v527 = vunpack.c.l.b16 %v426
    %v528 = vunpack.c.h.b16 %v426
    %v529 = vunpack.c.l.b16 %v427
    %v530 = vunpack.c.h.b16 %v427
    %v531 = vunpack.c.l.b16 %v428
    %v532 = vunpack.c.h.b16 %v428
    %v533 = vunpack.c.l.b16 %v429
    %v534 = vunpack.c.h.b16 %v429
    %v535 = vunpack.c.l.b16 %v430
    %v536 = vunpack.c.h.b16 %v430
    %v537 = vunpack.c.l.b16 %v431
    %v538 = vunpack.c.h.b16 %v431
    %v539 = vunpack.c.l.b16 %v432
    %v540 = vunpack.c.h.b16 %v432
    %v541 = vunpack.c.l.b16 %v433
    %v542 = vunpack.c.h.b16 %v433
    %v543 = vunpack.c.l.b16 %v434
    %v544 = vunpack.c.h.b16 %v434
    %v545 = vunpack.c.l.b16 %v435
    %v546 = vunpack.c.h.b16 %v435
    %v547 = vunpack.c.l.b16 %v436
    %v548 = vunpack.c.h.b16 %v436
    %v549 = vunpack.c.l.b16 %v437
    %v550 = vunpack.c.h.b16 %v437
    %v551 = vunpack.c.l.b16 %v438
    %v552 = vunpack.c.h.b16 %v438
    %v553 = vunpack.c.l.b16 %v439
    %v554 = vunpack.c.h.b16 %v439
    %v555 = vunpack.c.l.b16 %v440
    %v556 = vunpack.c.h.b16 %v440
    %v557 = vunpack.c.l.b16 %v441
    %v558 = vunpack.c.h.b16 %v441
    %v559 = vunpack.c.l.b16 %v442
    %v560 = vunpack.c.h.b16 %v442
    %v561 = vpack.c.b16 %v501, %v497
    %v562 = vpack.c.b16 %v502, %v498
    %v563 = vpack.c.b16 %v503, %v499
    %v564 = vpack.c.b16 %v504, %v500
    %v565 = vpack.c.b16 %v509, %v505
    %v566 = vpack.c.b16 %v510, %v506
    %v567 = vpack.c.b16 %v511, %v507
    %v568 = vpack.c.b16 %v512, %v508
    %v569 = vpack.c.b16 %v517, %v513
    %v570 = vpack.c.b16 %v518, %v514
    %v571 = vpack.c.b16 %v519, %v515
    %v572 = vpack.c.b16 %v520, %v516
    %v573 = vpack.c.b16 %v525, %v521
    %v574 = vpack.c.b16 %v526, %v522
    %v575 = vpack.c.b16 %v527, %v523
    %v576 = vpack.c.b16 %v528, %v524
    %v577 = vpack.c.b16 %v533, %v529
    %v578 = vpack.c.b16 %v534, %v530
    %v579 = vpack.c.b16 %v535, %v531
    %v580 = vpack.c.b16 %v536, %v532
    %v581 = vpack.c.b16 %v541, %v537
    %v582 = vpack.c.b16 %v542, %v538
    %v583 = vpack.c.b16 %v543, %v539
    %v584 = vpack.c.b16 %v544, %v540
    %v585 = vpack.c.b16 %v549, %v545
    %v586 = vpack.c.b16 %v550, %v546
    %v587 = vpack.c.b16 %v551, %v547
    %v588 = vpack.c.b16 %v552, %v548
    %v589 = vpack.c.b16 %v557, %v553
    %v590 = vpack.c.b16 %v558, %v554
    %v591 = vpack.c.b16 %v559, %v555
    %v592 = vpack.c.b16 %v560, %v556
    %625 = vmatprep.subr.bf16.mxu0 %v590
    %626 = vmatpush1.bf16.msra.mxu0 %v589
    %627 = vmatprep.subr.bf16.mxu0 %v586
    %628 = vmatpush1.bf16.msra.mxu0 %v585
    %629 = vmatprep.subr.bf16.mxu0 %v582
    %630 = vmatpush1.bf16.msra.mxu0 %v581
    %631 = vmatprep.subr.bf16.mxu0 %v578
    %632 = vmatpush1.bf16.msra.mxu0 %v577
    %633 = vmatprep.subr.bf16.mxu0 %v574
    %634 = vmatpush1.bf16.msra.mxu0 %v573
    %635 = vmatprep.subr.bf16.mxu0 %v570
    %636 = vmatpush1.bf16.msra.mxu0 %v569
    %637 = vmatprep.subr.bf16.mxu0 %v566
    %638 = vmatpush1.bf16.msra.mxu0 %v565
    %639 = vmatprep.subr.bf16.mxu0 %v562
    %640 = vmatpush1.bf16.msra.mxu0 %v561
    %641 = vmatprep.subr.bf16.mxu0 0
    %642 = vmatpush2.bf16.msra.mxu0 0
    %643 = vmatprep.subr.bf16.mxu0 0
    %644 = vmatpush2.bf16.msra.mxu0 0
    %645 = vmatprep.subr.bf16.mxu0 0
    %646 = vmatpush2.bf16.msra.mxu0 0
    %647 = vmatprep.subr.bf16.mxu0 0
    %648 = vmatpush2.bf16.msra.mxu0 0
    %649 = vmatprep.subr.bf16.mxu0 0
    %650 = vmatpush2.bf16.msra.mxu0 0
    %651 = vmatprep.subr.bf16.mxu0 0
    %652 = vmatpush2.bf16.msra.mxu0 0
    %653 = vmatprep.subr.bf16.mxu0 0
    %654 = vmatpush2.bf16.msra.mxu0 0
    %655 = vmatprep.subr.bf16.mxu0 0
    %656 = vmatpush2.bf16.msra.mxu0 0
    %657 = vmatprep.mubr.bf16.mxu0 0
    %658 = vmatmul.mubr.bf16.gmra.mxu0 %v407
    %v659 = vpop.f32.mrf.mxu0
    %v660 = vadd.f32 %v448, %v659
    %v661 = vpop.f32.mrf.mxu0
    %v662 = vadd.f32 %v452, %v661
    %v663 = vpop.f32.mrf.mxu0
    %v664 = vadd.f32 %v448, %v663
    %v665 = vpop.f32.mrf.mxu0
    %v666 = vadd.f32 %v452, %v665
    %667 = vmatprep.mubr.bf16.mxu0 0
    %668 = vmatmul.mubr.bf16.gmra.mxu0 %v408
    %v669 = vpop.f32.mrf.mxu0
    %v670 = vadd.f32 %v448, %v669
    %v671 = vpop.f32.mrf.mxu0
    %v672 = vadd.f32 %v452, %v671
    %v673 = vpop.f32.mrf.mxu0
    %v674 = vadd.f32 %v448, %v673
    %v675 = vpop.f32.mrf.mxu0
    %v676 = vadd.f32 %v452, %v675
    %677 = vmatprep.mubr.bf16.mxu0 0
    %678 = vmatmul.mubr.bf16.gmra.mxu0 %v409
    %v679 = vpop.f32.mrf.mxu0
    %v680 = vadd.f32 %v448, %v679
    %v681 = vpop.f32.mrf.mxu0
    %v682 = vadd.f32 %v452, %v681
    %v683 = vpop.f32.mrf.mxu0
    %v684 = vadd.f32 %v448, %v683
    %v685 = vpop.f32.mrf.mxu0
    %v686 = vadd.f32 %v452, %v685
    %687 = vmatprep.mubr.bf16.mxu0 0
    %688 = vmatmul.mubr.bf16.gmra.mxu0 %v410
    %v689 = vpop.f32.mrf.mxu0
    %v690 = vadd.f32 %v448, %v689
    %v691 = vpop.f32.mrf.mxu0
    %v692 = vadd.f32 %v452, %v691
    %v693 = vpop.f32.mrf.mxu0
    %v694 = vadd.f32 %v448, %v693
    %v695 = vpop.f32.mrf.mxu0
    %v696 = vadd.f32 %v452, %v695
    %697 = vdwg.mxu0
    %698 = vmatprep.subr.bf16.mxu0 %v592
    %699 = vmatpush1.bf16.msra.mxu0 %v591
    %700 = vmatprep.subr.bf16.mxu0 %v588
    %701 = vmatpush1.bf16.msra.mxu0 %v587
    %702 = vmatprep.subr.bf16.mxu0 %v584
    %703 = vmatpush1.bf16.msra.mxu0 %v583
    %704 = vmatprep.subr.bf16.mxu0 %v580
    %705 = vmatpush1.bf16.msra.mxu0 %v579
    %706 = vmatprep.subr.bf16.mxu0 %v576
    %707 = vmatpush1.bf16.msra.mxu0 %v575
    %708 = vmatprep.subr.bf16.mxu0 %v572
    %709 = vmatpush1.bf16.msra.mxu0 %v571
    %710 = vmatprep.subr.bf16.mxu0 %v568
    %711 = vmatpush1.bf16.msra.mxu0 %v567
    %712 = vmatprep.subr.bf16.mxu0 %v564
    %713 = vmatpush1.bf16.msra.mxu0 %v563
    %714 = vmatprep.subr.bf16.mxu0 0
    %715 = vmatpush2.bf16.msra.mxu0 0
    %716 = vmatprep.subr.bf16.mxu0 0
    %717 = vmatpush2.bf16.msra.mxu0 0
    %718 = vmatprep.subr.bf16.mxu0 0
    %719 = vmatpush2.bf16.msra.mxu0 0
    %720 = vmatprep.subr.bf16.mxu0 0
    %721 = vmatpush2.bf16.msra.mxu0 0
    %722 = vmatprep.subr.bf16.mxu0 0
    %723 = vmatpush2.bf16.msra.mxu0 0
    %724 = vmatprep.subr.bf16.mxu0 0
    %725 = vmatpush2.bf16.msra.mxu0 0
    %726 = vmatprep.subr.bf16.mxu0 0
    %727 = vmatpush2.bf16.msra.mxu0 0
    %728 = vmatprep.subr.bf16.mxu0 0
    %729 = vmatpush2.bf16.msra.mxu0 0
    %730 = vmatprep.mubr.bf16.mxu0 0
    %731 = vmatmul.mubr.bf16.gmra.mxu0 %v407
    %v732 = vpop.f32.mrf.mxu0
    %v733 = vadd.f32 %v456, %v732
    %v734 = vpop.f32.mrf.mxu0
    %v735 = vadd.f32 %v460, %v734
    %v736 = vpop.f32.mrf.mxu0
    %v737 = vadd.f32 %v456, %v736
    %v738 = vpop.f32.mrf.mxu0
    %v739 = vadd.f32 %v460, %v738
    %740 = vmatprep.mubr.bf16.mxu0 0
    %741 = vmatmul.mubr.bf16.gmra.mxu0 %v408
    %v742 = vpop.f32.mrf.mxu0
    %v743 = vadd.f32 %v456, %v742
    %v744 = vpop.f32.mrf.mxu0
    %v745 = vadd.f32 %v460, %v744
    %v746 = vpop.f32.mrf.mxu0
    %v747 = vadd.f32 %v456, %v746
    %v748 = vpop.f32.mrf.mxu0
    %v749 = vadd.f32 %v460, %v748
    %750 = vmatprep.mubr.bf16.mxu0 0
    %751 = vmatmul.mubr.bf16.gmra.mxu0 %v409
    %v752 = vpop.f32.mrf.mxu0
    %v753 = vadd.f32 %v456, %v752
    %v754 = vpop.f32.mrf.mxu0
    %v755 = vadd.f32 %v460, %v754
    %v756 = vpop.f32.mrf.mxu0
    %v757 = vadd.f32 %v456, %v756
    %v758 = vpop.f32.mrf.mxu0
    %v759 = vadd.f32 %v460, %v758
    %760 = vmatprep.mubr.bf16.mxu0 0
    %761 = vmatmul.mubr.bf16.gmra.mxu0 %v410
    %v762 = vpop.f32.mrf.mxu0
    %v763 = vadd.f32 %v456, %v762
    %v764 = vpop.f32.mrf.mxu0
    %v765 = vadd.f32 %v460, %v764
    %v766 = vpop.f32.mrf.mxu0
    %v767 = vadd.f32 %v456, %v766
    %v768 = vpop.f32.mrf.mxu0
    %v769 = vadd.f32 %v460, %v768
    %770 = vdwg.mxu0
    %771 = vst [vmem:[#allocation10] sm:$0xff] %v660
    %772 = vst [vmem:[#allocation10 + $0x8] sm:$0xff] %v662
    %773 = vst [vmem:[#allocation10 + $0x10] sm:$0xff] %v733
    %774 = vst [vmem:[#allocation10 + $0x18] sm:$0xff] %v735
    %775 = vst [vmem:[#allocation10 + $0x20] sm:$0xff] %v664
    %776 = vst [vmem:[#allocation10 + $0x28] sm:$0xff] %v666
    %777 = vst [vmem:[#allocation10 + $0x30] sm:$0xff] %v737
    %778 = vst [vmem:[#allocation10 + $0x38] sm:$0xff] %v739
    %779 = vst [vmem:[#allocation10 + $0x40] sm:$0xff] %v670
    %780 = vst [vmem:[#allocation10 + $0x48] sm:$0xff] %v672
    %781 = vst [vmem:[#allocation10 + $0x50] sm:$0xff] %v743
    %782 = vst [vmem:[#allocation10 + $0x58] sm:$0xff] %v745
    %783 = vst [vmem:[#allocation10 + $0x60] sm:$0xff] %v674
    %784 = vst [vmem:[#allocation10 + $0x68] sm:$0xff] %v676
    %785 = vst [vmem:[#allocation10 + $0x70] sm:$0xff] %v747
    %786 = vst [vmem:[#allocation10 + $0x78] sm:$0xff] %v749
    %787 = vst [vmem:[#allocation10 + $0x80] sm:$0xff] %v680
    %788 = vst [vmem:[#allocation10 + $0x88] sm:$0xff] %v682
    %789 = vst [vmem:[#allocation10 + $0x90] sm:$0xff] %v753
    %790 = vst [vmem:[#allocation10 + $0x98] sm:$0xff] %v755
    %791 = vst [vmem:[#allocation10 + $0xa0] sm:$0xff] %v684
    %792 = vst [vmem:[#allocation10 + $0xa8] sm:$0xff] %v686
    %793 = vst [vmem:[#allocation10 + $0xb0] sm:$0xff] %v757
    %794 = vst [vmem:[#allocation10 + $0xb8] sm:$0xff] %v759
    %795 = vst [vmem:[#allocation10 + $0xc0] sm:$0xff] %v690
    %796 = vst [vmem:[#allocation10 + $0xc8] sm:$0xff] %v692
    %797 = vst [vmem:[#allocation10 + $0xd0] sm:$0xff] %v763
    %798 = vst [vmem:[#allocation10 + $0xd8] sm:$0xff] %v765
    %799 = vst [vmem:[#allocation10 + $0xe0] sm:$0xff] %v694
    %800 = vst [vmem:[#allocation10 + $0xe8] sm:$0xff] %v696
    %801 = vst [vmem:[#allocation10 + $0xf0] sm:$0xff] %v767
    %802 = vst [vmem:[#allocation10 + $0xf8] sm:$0xff] %v769
    // Predicated region
    $region46: #{tpu_custom_call.1} parent=1 // pred_check
      _
    $region47: #{tpu_custom_call.1} parent=1 // pred_check_branch
      %804 = sbr.rel (0) target = $region49
    $region48: #{tpu_custom_call.1} parent=1 // pred_region
      %s806 = ssub.s32 4096, 4096
      %807 = vsyncadd [#allocation4], %s806
      %s808 = sshll.u32 [#allocation10], 4
      %s809 = int_to_ptr.vmem [resolvable:$true] %s808
      %814 = dma.vmem_to_hbm [thread:$0]  %s809, 4096, %s7, [#allocation4], 512, 512, 32
    $region49: #{tpu_custom_call.1} parent=1 // pred_fallthru
      _
    // Predicated region
    $region50: #{tpu_custom_call.1} parent=1 // pred_check
      _
    $region51: #{tpu_custom_call.1} parent=1 // pred_check_branch
      %816 = sbr.rel (0) target = $region53
    $region52: #{tpu_custom_call.1} parent=1 // pred_region
      %817 = dma.done [#allocation4], 4096
    $region53: #{tpu_custom_call.1} parent=1 // pred_fallthru
      _
    %818 = vsyncpa [#allocation3], 1
    %819 = vsyncpa [#allocation6], 1
    %820 = vsyncpa [#allocation9], 1
    %821 = vsyncpa [#allocation4], 1

</llo_original>
